<compile_context>
chip_gen: v5e
topology: v5e:2x2
jax: 0.10.0
libtpu: 0.0.40
codegen_flags: <defaults>
</compile_context>

<pallas_src>
import jax
import jax.numpy as jnp
from jax.experimental import pallas as pl
from jax.experimental.pallas import tpu as pltpu

LATENT = 2     # fixed by the module: z_tilde has shape (batch, 2)
HIDDEN = 128   # decoder hidden width (fills v5e's 128-deep MXU; keep, don't raise)
OUT = 784      # MNIST decoder output width
OUT_PAD = ((OUT + 127) // 128) * 128   # 896, lane-dense


def decoder_kernel(z_ref, w1_ref, w2_ref, b2_ref, o_ref):
    # Per grid step the working set is ~0.3 MiB — single full VMEM block per tile.
    z = z_ref[...]                                        # (TB, 2) f32

    # Layer 1 on the VPU in f32: K=2 would fill only 2/128 (v5e) or 2/256
    # (v6e/v7x) of the MXU contraction depth, so do it as broadcast FMAs.
    # b1 is folded in as row 2 of the augmented W1.
    h = (z[:, 0:1] * w1_ref[0:1, :]
         + z[:, 1:2] * w1_ref[1:2, :]
         + w1_ref[2:3, :])                                # (TB, HIDDEN) f32
    h = jnp.maximum(h, 0.0)                               # ReLU on VPU

    # Layer 2: the only MXU op.  bf16 x bf16 with f32 accumulation; output width
    # is a multiple of 128 -> unmasked stores on every lane tile.
    y = jnp.dot(h.astype(jnp.bfloat16), w2_ref[...],
                preferred_element_type=jnp.float32) + b2_ref[...]

    # sigmoid(y) = 1 / (1 + exp(-y)) with exp + approx reciprocal both on the EUP.
    e = jnp.exp(-y)
    o_ref[...] = pl.reciprocal(1.0 + e, approx=True)


def prepare_decoder_params(w1, b1, w2, b2):
    """One-time parameter prep (hoisted out of the per-call hot path).

    Folds b1 into W1 as a third row, pads W2/b2 to the lane-dense width and
    casts W2 to bf16 for the MXU.
    """
    w1_aug = jnp.concatenate([w1, b1], axis=0).astype(jnp.float32)          # (3, H)
    w2_pad = jnp.pad(w2, ((0, 0), (0, OUT_PAD - OUT))).astype(jnp.bfloat16)  # (H, OUT_PAD)
    b2_pad = jnp.pad(b2, ((0, 0), (0, OUT_PAD - OUT))).astype(jnp.float32)   # (1, OUT_PAD)
    return w1_aug, w2_pad, b2_pad


def tilda_forward(z_tilde, w1_aug, w2_pad, b2_pad, *, block_b=128):
    """Fused decoder forward on the pre-prepared parameters."""
    B = z_tilde.shape[0]
    H = w1_aug.shape[1]

    # Row-block the batch: TB rows per grid step (multiple of 8 sublanes).
    B8 = ((B + 7) // 8) * 8
    TB = min(block_b, B8)
    B_pad = ((B8 + TB - 1) // TB) * TB
    if B_pad != B:
        z_in = jnp.pad(z_tilde, ((0, B_pad - B), (0, 0)))
    else:
        z_in = z_tilde
    grid = (B_pad // TB,)

    flops = 2 * B_pad * H * OUT_PAD + 6 * B_pad * H       # matmul + layer-1 FMAs
    bytes_accessed = (4 * z_in.size + 4 * w1_aug.size + 2 * w2_pad.size
                      + 4 * b2_pad.size + 4 * B_pad * OUT_PAD)

    out_pad = pl.pallas_call(
        decoder_kernel,
        out_shape=jax.ShapeDtypeStruct((B_pad, OUT_PAD), jnp.float32),
        grid=grid,
        in_specs=[
            pl.BlockSpec((TB, LATENT), lambda i: (i, 0)),      # z rows for this tile
            pl.BlockSpec((3, H), lambda i: (0, 0)),            # W1_aug (resident)
            pl.BlockSpec((H, OUT_PAD), lambda i: (0, 0)),      # W2 bf16 (resident)
            pl.BlockSpec((1, OUT_PAD), lambda i: (0, 0)),      # b2
        ],
        out_specs=pl.BlockSpec((TB, OUT_PAD), lambda i: (i, 0)),
        compiler_params=pltpu.CompilerParams(
            dimension_semantics=("parallel",)),                # v7x: shard batch over 2 TCs
        cost_estimate=pl.CostEstimate(
            flops=flops,
            transcendentals=B_pad * OUT_PAD,                   # exp per output element
            bytes_accessed=bytes_accessed,
        ),
    )(z_in, w1_aug, w2_pad, b2_pad)

    # Drop batch and lane padding outside the kernel.
    return out_pad[:B, :OUT]


if __name__ == "__main__":
    B = 8          # batch_size passed to Tilda.__init__

    key = jax.random.PRNGKey(0)
    kz, kw1, kb1, kw2, kb2 = jax.random.split(key, 5)

    # Deterministic stand-in for np.random.normal(size=(batch_size, 2)) parameter.
    z_tilde = jax.random.normal(kz, (B, LATENT), dtype=jnp.float32)

    # Deterministic synthetic decoder parameters (f32 "master" copies).
    w1 = jax.random.normal(kw1, (LATENT, HIDDEN), dtype=jnp.float32) * 0.1
    b1 = jax.random.normal(kb1, (1, HIDDEN), dtype=jnp.float32) * 0.1
    w2 = jax.random.normal(kw2, (HIDDEN, OUT), dtype=jnp.float32) * 0.1
    b2 = jax.random.normal(kb2, (1, OUT), dtype=jnp.float32) * 0.1

    # One-time parameter prep (outside the forward path).
    w1_aug, w2_pad, b2_pad = prepare_decoder_params(w1, b1, w2, b2)
    w1_aug, w2_pad, b2_pad = jax.block_until_ready((w1_aug, w2_pad, b2_pad))

    out = tilda_forward(z_tilde, w1_aug, w2_pad, b2_pad)
    out = jax.block_until_ready(out)

    # Pure-JAX f32 reference for the same decoder applied to z_tilde.
    ref = jax.nn.sigmoid(
        jnp.maximum(z_tilde @ w1 + b1, 0.0) @ w2 + b2
    )
    assert out.shape == (B, OUT)
    # Tolerance loosened for bf16 W2 + approx EUP reciprocal (sigmoid output in [0,1]).
    assert jnp.allclose(out, ref, atol=2e-2, rtol=2e-2), float(
        jnp.max(jnp.abs(out - ref)))

    print("KERNEL_OK")
</pallas_src>

<mosaic_0001>
module attributes {stable_mosaic.version = 11 : i64} {
  func.func @decoder_kernel(%arg0: i32, %arg1: memref<8x2xf32, #tpu.memory_space<vmem>>, %arg2: memref<3x128xf32, #tpu.memory_space<vmem>>, %arg3: memref<128x896xbf16, #tpu.memory_space<vmem>>, %arg4: memref<1x896xf32, #tpu.memory_space<vmem>>, %arg5: memref<8x896xf32, #tpu.memory_space<vmem>>) attributes {dimension_semantics = [#tpu.dimension_semantics<parallel>], iteration_bounds = array<i64: 1>, scalar_prefetch = 0 : i64, scratch_operands = 0 : i64, tpu.core_type = #tpu.core_type<tc>, window_params = [{transform_indices = @transform_0, window_bounds = array<i64: 8, 2>}, {pipeline_mode = #tpu.pipeline_mode<synchronous>, transform_indices = @transform_1, window_bounds = array<i64: 3, 128>}, {pipeline_mode = #tpu.pipeline_mode<synchronous>, transform_indices = @transform_2, window_bounds = array<i64: 128, 896>}, {pipeline_mode = #tpu.pipeline_mode<synchronous>, transform_indices = @transform_3, window_bounds = array<i64: 1, 896>}, {transform_indices = @transform_4, window_bounds = array<i64: 8, 896>}]} {
    %c0 = arith.constant 0 : index
    %c0_0 = arith.constant 0 : index
    %0 = vector.load %arg1[%c0, %c0_0] : memref<8x2xf32, #tpu.memory_space<vmem>>, vector<8x2xf32>
    %1 = vector.extract_strided_slice %0 {offsets = [0, 0], sizes = [8, 1], strides = [1, 1]} : vector<8x2xf32> to vector<8x1xf32>
    %c0_1 = arith.constant 0 : index
    %c0_2 = arith.constant 0 : index
    %2 = vector.load %arg2[%c0_1, %c0_2] : memref<3x128xf32, #tpu.memory_space<vmem>>, vector<1x128xf32>
    %3 = vector.broadcast %1 : vector<8x1xf32> to vector<8x128xf32>
    %4 = vector.broadcast %2 : vector<1x128xf32> to vector<8x128xf32>
    %5 = arith.mulf %3, %4 : vector<8x128xf32>
    %6 = vector.extract_strided_slice %0 {offsets = [0, 1], sizes = [8, 1], strides = [1, 1]} : vector<8x2xf32> to vector<8x1xf32>
    %c1 = arith.constant 1 : index
    %c0_3 = arith.constant 0 : index
    %7 = vector.load %arg2[%c1, %c0_3] : memref<3x128xf32, #tpu.memory_space<vmem>>, vector<1x128xf32>
    %8 = vector.broadcast %6 : vector<8x1xf32> to vector<8x128xf32>
    %9 = vector.broadcast %7 : vector<1x128xf32> to vector<8x128xf32>
    %10 = arith.mulf %8, %9 : vector<8x128xf32>
    %11 = arith.addf %5, %10 : vector<8x128xf32>
    %c2 = arith.constant 2 : index
    %c0_4 = arith.constant 0 : index
    %12 = vector.load %arg2[%c2, %c0_4] : memref<3x128xf32, #tpu.memory_space<vmem>>, vector<1x128xf32>
    %13 = vector.broadcast %12 : vector<1x128xf32> to vector<8x128xf32>
    %14 = arith.addf %11, %13 : vector<8x128xf32>
    %cst = arith.constant 0.000000e+00 : f32
    %15 = vector.broadcast %cst : f32 to vector<8x128xf32>
    %16 = arith.maximumf %14, %15 : vector<8x128xf32>
    %17 = arith.truncf %16 : vector<8x128xf32> to vector<8x128xbf16>
    %c0_5 = arith.constant 0 : index
    %c0_6 = arith.constant 0 : index
    %18 = vector.load %arg3[%c0_5, %c0_6] : memref<128x896xbf16, #tpu.memory_space<vmem>>, vector<128x896xbf16>
    %cst_7 = arith.constant dense<0.000000e+00> : vector<8x896xf32>
    %19 = tpu.matmul %17, %18, %cst_7 {dimension_numbers = #tpu.dot_dimension_numbers<[1], [0], [0], [1], [0, 0, 1, 1], [], []>} : vector<8x128xbf16>, vector<128x896xbf16>, vector<8x896xf32> -> vector<8x896xf32>
    %c0_8 = arith.constant 0 : index
    %c0_9 = arith.constant 0 : index
    %20 = vector.load %arg4[%c0_8, %c0_9] : memref<1x896xf32, #tpu.memory_space<vmem>>, vector<1x896xf32>
    %21 = vector.broadcast %20 : vector<1x896xf32> to vector<8x896xf32>
    %22 = arith.addf %19, %21 : vector<8x896xf32>
    %cst_10 = arith.constant 0.000000e+00 : f32
    %23 = vector.broadcast %cst_10 : f32 to vector<8x896xf32>
    %24 = arith.subf %23, %22 : vector<8x896xf32>
    %25 = math.exp %24 : vector<8x896xf32>
    %cst_11 = arith.constant 1.000000e+00 : f32
    %26 = vector.broadcast %cst_11 : f32 to vector<8x896xf32>
    %27 = arith.addf %26, %25 : vector<8x896xf32>
    %28 = tpu.reciprocal %27 {approx = true} : vector<8x896xf32> -> vector<8x896xf32>
    %c0_12 = arith.constant 0 : index
    %c0_13 = arith.constant 0 : index
    %29 = vector.load %arg5[%c0_12, %c0_13] : memref<8x896xf32, #tpu.memory_space<vmem>>, vector<8x896xf32>
    tpu.vector_store %arg5[%c0_12, %c0_13], %28 {strides = array<i32>} : memref<8x896xf32, #tpu.memory_space<vmem>>, vector<8x896xf32>,
    return
  }
  func.func @transform_0(%arg0: i32) -> (i32, i32) {
    %c0_i32 = arith.constant 0 : i32
    %c0_i32_0 = arith.constant 0 : i32
    return %arg0, %c0_i32 : i32, i32
  }
  func.func @transform_1(%arg0: i32) -> (i32, i32) {
    %c0_i32 = arith.constant 0 : i32
    %c0_i32_0 = arith.constant 0 : i32
    %c0_i32_1 = arith.constant 0 : i32
    return %c0_i32, %c0_i32_0 : i32, i32
  }
  func.func @transform_2(%arg0: i32) -> (i32, i32) {
    %c0_i32 = arith.constant 0 : i32
    %c0_i32_0 = arith.constant 0 : i32
    %c0_i32_1 = arith.constant 0 : i32
    return %c0_i32, %c0_i32_0 : i32, i32
  }
  func.func @transform_3(%arg0: i32) -> (i32, i32) {
    %c0_i32 = arith.constant 0 : i32
    %c0_i32_0 = arith.constant 0 : i32
    %c0_i32_1 = arith.constant 0 : i32
    return %c0_i32, %c0_i32_0 : i32, i32
  }
  func.func @transform_4(%arg0: i32) -> (i32, i32) {
    %c0_i32 = arith.constant 0 : i32
    %c0_i32_0 = arith.constant 0 : i32
    return %arg0, %c0_i32 : i32, i32
  }
}

</mosaic_0001>

<llo_original>
// kernel: tpu_custom_call.1
$region0: #{tpu_custom_call.1}
  #allocation0 [shape = 'u32[]', space=smem, size = 0x4, offset = 0x4, fixed_abs, tag = 'smem constant byte address 0x4 - core index']
  #allocation1 [shape = 'u32[72,128]{1,0:T(1,128)}', space=vmem, size = 0x9000, scoped, tag = 'internal scratch']
  %s0 = inlined_call_operand.vmem [shape: f32[8,2], index: 0, kind: input, shape index: {}]
  %s1 = inlined_call_operand.vmem [shape: f32[3,128], index: 1, kind: input, shape index: {}]
  %s2 = inlined_call_operand.hbm [shape: bf16[128,896], index: 2, kind: input, shape index: {}]
  %s3 = inlined_call_operand.vmem [shape: f32[1,896], index: 3, kind: input, shape index: {}]
  %s4 = inlined_call_operand.hbm [shape: f32[8,896], index: 4, kind: output, shape index: {}]
  %s5 = sld [smem:[#allocation0]]
  $region30: #{tpu_custom_call.1} parent=0
    _
  %s7 = ssub.s32 1, %s5
  %s8 = scalar_select 0, %s7, %s5
  $region1: #{tpu_custom_call.1} parent=0
    #allocation2 [shape = 'u8[229376]{0}', space=vmem, size = 0x38000, scoped, tag = 'input window, operand 2, single buffered']
    #allocation3 [shape = 's32[1]{0}', space=sflag, size = 0x4, scoped, tag = 'scoped memory for tpu_custom_call.1']
    #allocation4 [shape = 's32[1]{0}', space=sflag, size = 0x4, scoped, tag = 'scoped memory for tpu_custom_call.1']
    #allocation5 [shape = 'u8[28672]{0}', space=vmem, size = 0x7000, scoped, tag = 'output window, operand 0, single buffered']
    %9 = vsyncpa [#allocation3], 0
    %10 = vsyncpa [#allocation4], 0
    // Predicated region
    $region2: #{tpu_custom_call.1} parent=1 // pred_check
      _
    $region3: #{tpu_custom_call.1} parent=1 // pred_check_branch
      %12 = sbr.rel (0) target = $region5
    $region4: #{tpu_custom_call.1} parent=1 // pred_region
      _
    $region5: #{tpu_custom_call.1} parent=1 // pred_fallthru
      _
    // Predicated region
    $region6: #{tpu_custom_call.1} parent=1 // pred_check
      _
    $region7: #{tpu_custom_call.1} parent=1 // pred_check_branch
      %14 = sbr.rel (0) target = $region9
    $region8: #{tpu_custom_call.1} parent=1 // pred_region
      _
    $region9: #{tpu_custom_call.1} parent=1 // pred_fallthru
      _
    // Predicated region
    $region10: #{tpu_custom_call.1} parent=1 // pred_check
      _
    $region11: #{tpu_custom_call.1} parent=1 // pred_check_branch
      %16 = sbr.rel (0) target = $region13
    $region12: #{tpu_custom_call.1} parent=1 // pred_region
      %18 = vsyncadd [#allocation3], 0
      %s19 = sshll.u32 %s2, 4
      %s20 = int_to_ptr.hbm [resolvable:$true] %s19
      %s21 = sshll.u32 [#allocation2], 4
      %s22 = int_to_ptr.vmem [resolvable:$true] %s21
      %27 = dma.hbm_to_vmem [thread:$0]  %s20, 7168, %s22, [#allocation3], 448, 448, 28
    $region13: #{tpu_custom_call.1} parent=1 // pred_fallthru
      _
    // Predicated region
    $region14: #{tpu_custom_call.1} parent=1 // pred_check
      _
    $region15: #{tpu_custom_call.1} parent=1 // pred_check_branch
      %29 = sbr.rel (0) target = $region17
    $region16: #{tpu_custom_call.1} parent=1 // pred_region
      _
    $region17: #{tpu_custom_call.1} parent=1 // pred_fallthru
      _
    // Predicated region
    $region18: #{tpu_custom_call.1} parent=1 // pred_check
      _
    $region19: #{tpu_custom_call.1} parent=1 // pred_check_branch
      %31 = sbr.rel (0) target = $region21
    $region20: #{tpu_custom_call.1} parent=1 // pred_region
      %33 = dma.done [#allocation3], 7168
    $region21: #{tpu_custom_call.1} parent=1 // pred_fallthru
      _
    %v34 = vld [vmem:[%s0] sm:$0xff]
    %v35 = vld [vmem:[%s1] sm:$0x1]
    %37 = vset.pattern.permute.xlu0 0
    %38 = vperm.xlu0 %37, %v34
    %v39 = vpop.permute.xlu0 %38
    %v41 = vperm.slane %v35, 0
    %v42 = vmul.f32 %v39, %v41
    %v43 = vld [vmem:[%s1 + $0x1] sm:$0x1]
    %44 = vset.pattern.permute.xlu0 1
    %45 = vperm.xlu0 %44, %v34
    %v46 = vpop.permute.xlu0 %45
    %v48 = vperm.slane %v43, 0
    %v49 = vmul.f32 %v46, %v48
    %v50 = vadd.f32 %v42, %v49
    %v51 = vld [vmem:[%s1 + $0x2] sm:$0x1]
    %v52 = vperm.slane %v51, 0
    %v53 = vadd.f32 %v50, %v52
    %v54 = vmax.f32 %v53, 0.0
    %v55 = vpack.c.bf16 %v54, %v54
    %v56 = vld [vmem:[#allocation2] sm:$0xff]
    %v57 = vld [vmem:[#allocation2 + $0x8] sm:$0xff]
    %v58 = vld [vmem:[#allocation2 + $0x10] sm:$0xff]
    %v59 = vld [vmem:[#allocation2 + $0x18] sm:$0xf]
    %v60 = vld [vmem:[#allocation2 + $0x1c] sm:$0xff]
    %v61 = vld [vmem:[#allocation2 + $0x24] sm:$0xff]
    %v62 = vld [vmem:[#allocation2 + $0x2c] sm:$0xff]
    %v63 = vld [vmem:[#allocation2 + $0x34] sm:$0xf]
    %v64 = vld [vmem:[#allocation2 + $0x38] sm:$0xff]
    %v65 = vld [vmem:[#allocation2 + $0x40] sm:$0xff]
    %v66 = vld [vmem:[#allocation2 + $0x48] sm:$0xff]
    %v67 = vld [vmem:[#allocation2 + $0x50] sm:$0xf]
    %v68 = vld [vmem:[#allocation2 + $0x54] sm:$0xff]
    %v69 = vld [vmem:[#allocation2 + $0x5c] sm:$0xff]
    %v70 = vld [vmem:[#allocation2 + $0x64] sm:$0xff]
    %v71 = vld [vmem:[#allocation2 + $0x6c] sm:$0xf]
    %v72 = vld [vmem:[#allocation2 + $0x70] sm:$0xff]
    %v73 = vld [vmem:[#allocation2 + $0x78] sm:$0xff]
    %v74 = vld [vmem:[#allocation2 + $0x80] sm:$0xff]
    %v75 = vld [vmem:[#allocation2 + $0x88] sm:$0xf]
    %v76 = vld [vmem:[#allocation2 + $0x8c] sm:$0xff]
    %v77 = vld [vmem:[#allocation2 + $0x94] sm:$0xff]
    %v78 = vld [vmem:[#allocation2 + $0x9c] sm:$0xff]
    %v79 = vld [vmem:[#allocation2 + $0xa4] sm:$0xf]
    %v80 = vld [vmem:[#allocation2 + $0xa8] sm:$0xff]
    %v81 = vld [vmem:[#allocation2 + $0xb0] sm:$0xff]
    %v82 = vld [vmem:[#allocation2 + $0xb8] sm:$0xff]
    %v83 = vld [vmem:[#allocation2 + $0xc0] sm:$0xf]
    %v84 = vld [vmem:[#allocation2 + $0xc4] sm:$0xff]
    %v85 = vld [vmem:[#allocation2 + $0xcc] sm:$0xff]
    %v86 = vld [vmem:[#allocation2 + $0xd4] sm:$0xff]
    %v87 = vld [vmem:[#allocation2 + $0xdc] sm:$0xf]
    %v88 = vld [vmem:[#allocation2 + $0xe0] sm:$0xff]
    %v89 = vld [vmem:[#allocation2 + $0xe8] sm:$0xff]
    %v90 = vld [vmem:[#allocation2 + $0xf0] sm:$0xff]
    %v91 = vld [vmem:[#allocation2 + $0xf8] sm:$0xf]
    %v92 = vld [vmem:[#allocation2 + $0xfc] sm:$0xff]
    %v93 = vld [vmem:[#allocation2 + $0x104] sm:$0xff]
    %v94 = vld [vmem:[#allocation2 + $0x10c] sm:$0xff]
    %v95 = vld [vmem:[#allocation2 + $0x114] sm:$0xf]
    %v96 = vld [vmem:[#allocation2 + $0x118] sm:$0xff]
    %v97 = vld [vmem:[#allocation2 + $0x120] sm:$0xff]
    %v98 = vld [vmem:[#allocation2 + $0x128] sm:$0xff]
    %v99 = vld [vmem:[#allocation2 + $0x130] sm:$0xf]
    %v100 = vld [vmem:[#allocation2 + $0x134] sm:$0xff]
    %v101 = vld [vmem:[#allocation2 + $0x13c] sm:$0xff]
    %v102 = vld [vmem:[#allocation2 + $0x144] sm:$0xff]
    %v103 = vld [vmem:[#allocation2 + $0x14c] sm:$0xf]
    %v104 = vld [vmem:[#allocation2 + $0x150] sm:$0xff]
    %v105 = vld [vmem:[#allocation2 + $0x158] sm:$0xff]
    %v106 = vld [vmem:[#allocation2 + $0x160] sm:$0xff]
    %v107 = vld [vmem:[#allocation2 + $0x168] sm:$0xf]
    %v108 = vld [vmem:[#allocation2 + $0x16c] sm:$0xff]
    %v109 = vld [vmem:[#allocation2 + $0x174] sm:$0xff]
    %v110 = vld [vmem:[#allocation2 + $0x17c] sm:$0xff]
    %v111 = vld [vmem:[#allocation2 + $0x184] sm:$0xf]
    %v112 = vld [vmem:[#allocation2 + $0x188] sm:$0xff]
    %v113 = vld [vmem:[#allocation2 + $0x190] sm:$0xff]
    %v114 = vld [vmem:[#allocation2 + $0x198] sm:$0xff]
    %v115 = vld [vmem:[#allocation2 + $0x1a0] sm:$0xf]
    %v116 = vld [vmem:[#allocation2 + $0x1a4] sm:$0xff]
    %v117 = vld [vmem:[#allocation2 + $0x1ac] sm:$0xff]
    %v118 = vld [vmem:[#allocation2 + $0x1b4] sm:$0xff]
    %v119 = vld [vmem:[#allocation2 + $0x1bc] sm:$0xf]
    %v120 = vld [vmem:[%s3] sm:$0xff]
    %v122 = vperm.slane %v120, 0
    %v123 = vperm.slane %v120, 1
    %v124 = vperm.slane %v120, 2
    %v125 = vperm.slane %v120, 3
    %v126 = vperm.slane %v120, 4
    %v127 = vperm.slane %v120, 5
    %v128 = vperm.slane %v120, 6
    %v200 = vunpack.c.l.b16 %v56
    %v201 = vunpack.c.h.b16 %v56
    %v202 = vunpack.c.l.b16 %v57
    %v203 = vunpack.c.h.b16 %v57
    %v204 = vunpack.c.l.b16 %v58
    %v205 = vunpack.c.h.b16 %v58
    %v206 = vunpack.c.l.b16 %v59
    %v207 = vunpack.c.l.b16 %v60
    %v208 = vunpack.c.h.b16 %v60
    %v209 = vunpack.c.l.b16 %v61
    %v210 = vunpack.c.h.b16 %v61
    %v211 = vunpack.c.l.b16 %v62
    %v212 = vunpack.c.h.b16 %v62
    %v213 = vunpack.c.l.b16 %v63
    %v214 = vunpack.c.l.b16 %v64
    %v215 = vunpack.c.h.b16 %v64
    %v216 = vunpack.c.l.b16 %v65
    %v217 = vunpack.c.h.b16 %v65
    %v218 = vunpack.c.l.b16 %v66
    %v219 = vunpack.c.h.b16 %v66
    %v220 = vunpack.c.l.b16 %v67
    %v221 = vunpack.c.l.b16 %v68
    %v222 = vunpack.c.h.b16 %v68
    %v223 = vunpack.c.l.b16 %v69
    %v224 = vunpack.c.h.b16 %v69
    %v225 = vunpack.c.l.b16 %v70
    %v226 = vunpack.c.h.b16 %v70
    %v227 = vunpack.c.l.b16 %v71
    %v228 = vunpack.c.l.b16 %v72
    %v229 = vunpack.c.h.b16 %v72
    %v230 = vunpack.c.l.b16 %v73
    %v231 = vunpack.c.h.b16 %v73
    %v232 = vunpack.c.l.b16 %v74
    %v233 = vunpack.c.h.b16 %v74
    %v234 = vunpack.c.l.b16 %v75
    %v235 = vunpack.c.l.b16 %v76
    %v236 = vunpack.c.h.b16 %v76
    %v237 = vunpack.c.l.b16 %v77
    %v238 = vunpack.c.h.b16 %v77
    %v239 = vunpack.c.l.b16 %v78
    %v240 = vunpack.c.h.b16 %v78
    %v241 = vunpack.c.l.b16 %v79
    %v242 = vunpack.c.l.b16 %v80
    %v243 = vunpack.c.h.b16 %v80
    %v244 = vunpack.c.l.b16 %v81
    %v245 = vunpack.c.h.b16 %v81
    %v246 = vunpack.c.l.b16 %v82
    %v247 = vunpack.c.h.b16 %v82
    %v248 = vunpack.c.l.b16 %v83
    %v249 = vunpack.c.l.b16 %v84
    %v250 = vunpack.c.h.b16 %v84
    %v251 = vunpack.c.l.b16 %v85
    %v252 = vunpack.c.h.b16 %v85
    %v253 = vunpack.c.l.b16 %v86
    %v254 = vunpack.c.h.b16 %v86
    %v255 = vunpack.c.l.b16 %v87
    %v256 = vunpack.c.l.b16 %v88
    %v257 = vunpack.c.h.b16 %v88
    %v258 = vunpack.c.l.b16 %v89
    %v259 = vunpack.c.h.b16 %v89
    %v260 = vunpack.c.l.b16 %v90
    %v261 = vunpack.c.h.b16 %v90
    %v262 = vunpack.c.l.b16 %v91
    %v263 = vunpack.c.l.b16 %v92
    %v264 = vunpack.c.h.b16 %v92
    %v265 = vunpack.c.l.b16 %v93
    %v266 = vunpack.c.h.b16 %v93
    %v267 = vunpack.c.l.b16 %v94
    %v268 = vunpack.c.h.b16 %v94
    %v269 = vunpack.c.l.b16 %v95
    %v270 = vunpack.c.l.b16 %v96
    %v271 = vunpack.c.h.b16 %v96
    %v272 = vunpack.c.l.b16 %v97
    %v273 = vunpack.c.h.b16 %v97
    %v274 = vunpack.c.l.b16 %v98
    %v275 = vunpack.c.h.b16 %v98
    %v276 = vunpack.c.l.b16 %v99
    %v277 = vunpack.c.l.b16 %v100
    %v278 = vunpack.c.h.b16 %v100
    %v279 = vunpack.c.l.b16 %v101
    %v280 = vunpack.c.h.b16 %v101
    %v281 = vunpack.c.l.b16 %v102
    %v282 = vunpack.c.h.b16 %v102
    %v283 = vunpack.c.l.b16 %v103
    %v284 = vunpack.c.l.b16 %v104
    %v285 = vunpack.c.h.b16 %v104
    %v286 = vunpack.c.l.b16 %v105
    %v287 = vunpack.c.h.b16 %v105
    %v288 = vunpack.c.l.b16 %v106
    %v289 = vunpack.c.h.b16 %v106
    %v290 = vunpack.c.l.b16 %v107
    %v291 = vunpack.c.l.b16 %v108
    %v292 = vunpack.c.h.b16 %v108
    %v293 = vunpack.c.l.b16 %v109
    %v294 = vunpack.c.h.b16 %v109
    %v295 = vunpack.c.l.b16 %v110
    %v296 = vunpack.c.h.b16 %v110
    %v297 = vunpack.c.l.b16 %v111
    %v298 = vunpack.c.l.b16 %v112
    %v299 = vunpack.c.h.b16 %v112
    %v300 = vunpack.c.l.b16 %v113
    %v301 = vunpack.c.h.b16 %v113
    %v302 = vunpack.c.l.b16 %v114
    %v303 = vunpack.c.h.b16 %v114
    %v304 = vunpack.c.l.b16 %v115
    %v305 = vunpack.c.l.b16 %v116
    %v306 = vunpack.c.h.b16 %v116
    %v307 = vunpack.c.l.b16 %v117
    %v308 = vunpack.c.h.b16 %v117
    %v309 = vunpack.c.l.b16 %v118
    %v310 = vunpack.c.h.b16 %v118
    %v311 = vunpack.c.l.b16 %v119
    %v312 = vpack.c.b16 %v207, %v200
    %v313 = vpack.c.b16 %v208, %v201
    %v314 = vpack.c.b16 %v209, %v202
    %v315 = vpack.c.b16 %v210, %v203
    %v316 = vpack.c.b16 %v211, %v204
    %v317 = vpack.c.b16 %v212, %v205
    %v318 = vpack.c.b16 %v213, %v206
    %v319 = vpack.c.b16 %v221, %v214
    %v320 = vpack.c.b16 %v222, %v215
    %v321 = vpack.c.b16 %v223, %v216
    %v322 = vpack.c.b16 %v224, %v217
    %v323 = vpack.c.b16 %v225, %v218
    %v324 = vpack.c.b16 %v226, %v219
    %v325 = vpack.c.b16 %v227, %v220
    %v326 = vpack.c.b16 %v235, %v228
    %v327 = vpack.c.b16 %v236, %v229
    %v328 = vpack.c.b16 %v237, %v230
    %v329 = vpack.c.b16 %v238, %v231
    %v330 = vpack.c.b16 %v239, %v232
    %v331 = vpack.c.b16 %v240, %v233
    %v332 = vpack.c.b16 %v241, %v234
    %v333 = vpack.c.b16 %v249, %v242
    %v334 = vpack.c.b16 %v250, %v243
    %v335 = vpack.c.b16 %v251, %v244
    %v336 = vpack.c.b16 %v252, %v245
    %v337 = vpack.c.b16 %v253, %v246
    %v338 = vpack.c.b16 %v254, %v247
    %v339 = vpack.c.b16 %v255, %v248
    %v340 = vpack.c.b16 %v263, %v256
    %v341 = vpack.c.b16 %v264, %v257
    %v342 = vpack.c.b16 %v265, %v258
    %v343 = vpack.c.b16 %v266, %v259
    %v344 = vpack.c.b16 %v267, %v260
    %v345 = vpack.c.b16 %v268, %v261
    %v346 = vpack.c.b16 %v269, %v262
    %v347 = vpack.c.b16 %v277, %v270
    %v348 = vpack.c.b16 %v278, %v271
    %v349 = vpack.c.b16 %v279, %v272
    %v350 = vpack.c.b16 %v280, %v273
    %v351 = vpack.c.b16 %v281, %v274
    %v352 = vpack.c.b16 %v282, %v275
    %v353 = vpack.c.b16 %v283, %v276
    %v354 = vpack.c.b16 %v291, %v284
    %v355 = vpack.c.b16 %v292, %v285
    %v356 = vpack.c.b16 %v293, %v286
    %v357 = vpack.c.b16 %v294, %v287
    %v358 = vpack.c.b16 %v295, %v288
    %v359 = vpack.c.b16 %v296, %v289
    %v360 = vpack.c.b16 %v297, %v290
    %v361 = vpack.c.b16 %v305, %v298
    %v362 = vpack.c.b16 %v306, %v299
    %v363 = vpack.c.b16 %v307, %v300
    %v364 = vpack.c.b16 %v308, %v301
    %v365 = vpack.c.b16 %v309, %v302
    %v366 = vpack.c.b16 %v310, %v303
    %v367 = vpack.c.b16 %v311, %v304
    %424 = vmatpush.bf16.msra.mxu0 %v361
    %425 = vmatpush.bf16.msra.mxu0 %v354
    %426 = vmatpush.bf16.msra.mxu0 %v347
    %427 = vmatpush.bf16.msra.mxu0 %v340
    %428 = vmatpush.bf16.msra.mxu0 %v333
    %429 = vmatpush.bf16.msra.mxu0 %v326
    %430 = vmatpush.bf16.msra.mxu0 %v319
    %431 = vmatpush.bf16.msra.mxu0 %v312
    %432 = vmatmul.bf16.gmra.mxu0 %v55
    %v433 = vpop.f32.mrf.mxu0
    %v434 = vadd.f32 %v122, %v433
    %v435 = vpop.f32.mrf.mxu0
    %436 = vdwg.mxu0
    %437 = vmatpush.bf16.msra.mxu0 %v362
    %438 = vmatpush.bf16.msra.mxu0 %v355
    %439 = vmatpush.bf16.msra.mxu0 %v348
    %440 = vmatpush.bf16.msra.mxu0 %v341
    %441 = vmatpush.bf16.msra.mxu0 %v334
    %442 = vmatpush.bf16.msra.mxu0 %v327
    %443 = vmatpush.bf16.msra.mxu0 %v320
    %444 = vmatpush.bf16.msra.mxu0 %v313
    %445 = vmatmul.bf16.gmra.mxu0 %v55
    %v446 = vpop.f32.mrf.mxu0
    %v447 = vadd.f32 %v123, %v446
    %v448 = vpop.f32.mrf.mxu0
    %449 = vdwg.mxu0
    %450 = vmatpush.bf16.msra.mxu0 %v363
    %451 = vmatpush.bf16.msra.mxu0 %v356
    %452 = vmatpush.bf16.msra.mxu0 %v349
    %453 = vmatpush.bf16.msra.mxu0 %v342
    %454 = vmatpush.bf16.msra.mxu0 %v335
    %455 = vmatpush.bf16.msra.mxu0 %v328
    %456 = vmatpush.bf16.msra.mxu0 %v321
    %457 = vmatpush.bf16.msra.mxu0 %v314
    %458 = vmatmul.bf16.gmra.mxu0 %v55
    %v459 = vpop.f32.mrf.mxu0
    %v460 = vadd.f32 %v124, %v459
    %v461 = vpop.f32.mrf.mxu0
    %462 = vdwg.mxu0
    %463 = vmatpush.bf16.msra.mxu0 %v364
    %464 = vmatpush.bf16.msra.mxu0 %v357
    %465 = vmatpush.bf16.msra.mxu0 %v350
    %466 = vmatpush.bf16.msra.mxu0 %v343
    %467 = vmatpush.bf16.msra.mxu0 %v336
    %468 = vmatpush.bf16.msra.mxu0 %v329
    %469 = vmatpush.bf16.msra.mxu0 %v322
    %470 = vmatpush.bf16.msra.mxu0 %v315
    %471 = vmatmul.bf16.gmra.mxu0 %v55
    %v472 = vpop.f32.mrf.mxu0
    %v473 = vadd.f32 %v125, %v472
    %v474 = vpop.f32.mrf.mxu0
    %475 = vdwg.mxu0
    %476 = vmatpush.bf16.msra.mxu0 %v365
    %477 = vmatpush.bf16.msra.mxu0 %v358
    %478 = vmatpush.bf16.msra.mxu0 %v351
    %479 = vmatpush.bf16.msra.mxu0 %v344
    %480 = vmatpush.bf16.msra.mxu0 %v337
    %481 = vmatpush.bf16.msra.mxu0 %v330
    %482 = vmatpush.bf16.msra.mxu0 %v323
    %483 = vmatpush.bf16.msra.mxu0 %v316
    %484 = vmatmul.bf16.gmra.mxu0 %v55
    %v485 = vpop.f32.mrf.mxu0
    %v486 = vadd.f32 %v126, %v485
    %v487 = vpop.f32.mrf.mxu0
    %488 = vdwg.mxu0
    %489 = vmatpush.bf16.msra.mxu0 %v366
    %490 = vmatpush.bf16.msra.mxu0 %v359
    %491 = vmatpush.bf16.msra.mxu0 %v352
    %492 = vmatpush.bf16.msra.mxu0 %v345
    %493 = vmatpush.bf16.msra.mxu0 %v338
    %494 = vmatpush.bf16.msra.mxu0 %v331
    %495 = vmatpush.bf16.msra.mxu0 %v324
    %496 = vmatpush.bf16.msra.mxu0 %v317
    %497 = vmatmul.bf16.gmra.mxu0 %v55
    %v498 = vpop.f32.mrf.mxu0
    %v499 = vadd.f32 %v127, %v498
    %v500 = vpop.f32.mrf.mxu0
    %501 = vdwg.mxu0
    %502 = vmatpush.bf16.msra.mxu0 %v367
    %503 = vmatpush.bf16.msra.mxu0 %v360
    %504 = vmatpush.bf16.msra.mxu0 %v353
    %505 = vmatpush.bf16.msra.mxu0 %v346
    %506 = vmatpush.bf16.msra.mxu0 %v339
    %507 = vmatpush.bf16.msra.mxu0 %v332
    %508 = vmatpush.bf16.msra.mxu0 %v325
    %509 = vmatpush.bf16.msra.mxu0 %v318
    %510 = vmatmul.bf16.gmra.mxu0 %v55
    %v511 = vpop.f32.mrf.mxu0
    %v512 = vadd.f32 %v128, %v511
    %v513 = vpop.f32.mrf.mxu0
    %514 = vdwg.mxu0
    %v515 = vsub.f32 0.0, %v434
    %v516 = vsub.f32 0.0, %v447
    %v517 = vsub.f32 0.0, %v460
    %v518 = vsub.f32 0.0, %v473
    %v519 = vsub.f32 0.0, %v486
    %v520 = vsub.f32 0.0, %v499
    %v521 = vsub.f32 0.0, %v512
    %v522 = vmul.f32 %v515, 1.442695
    %v523 = vpow.pop %v522
    %v524 = vmul.f32 %v516, 1.442695
    %v525 = vpow.pop %v524
    %v526 = vmul.f32 %v517, 1.442695
    %v527 = vpow.pop %v526
    %v528 = vmul.f32 %v518, 1.442695
    %v529 = vpow.pop %v528
    %v530 = vmul.f32 %v519, 1.442695
    %v531 = vpow.pop %v530
    %v532 = vmul.f32 %v520, 1.442695
    %v533 = vpow.pop %v532
    %v534 = vmul.f32 %v521, 1.442695
    %v535 = vpow.pop %v534
    %v536 = vadd.f32 %v523, 1.0
    %v537 = vadd.f32 %v525, 1.0
    %v538 = vadd.f32 %v527, 1.0
    %v539 = vadd.f32 %v529, 1.0
    %v540 = vadd.f32 %v531, 1.0
    %v541 = vadd.f32 %v533, 1.0
    %v542 = vadd.f32 %v535, 1.0
    %v543 = vrcp.pop %v536
    %v544 = vrcp.pop %v537
    %v545 = vrcp.pop %v538
    %v546 = vrcp.pop %v539
    %v547 = vrcp.pop %v540
    %v548 = vrcp.pop %v541
    %v549 = vrcp.pop %v542
    %550 = vst [vmem:[#allocation5] sm:$0xff] %v543
    %551 = vst [vmem:[#allocation5 + $0x8] sm:$0xff] %v544
    %552 = vst [vmem:[#allocation5 + $0x10] sm:$0xff] %v545
    %553 = vst [vmem:[#allocation5 + $0x18] sm:$0xff] %v546
    %554 = vst [vmem:[#allocation5 + $0x20] sm:$0xff] %v547
    %555 = vst [vmem:[#allocation5 + $0x28] sm:$0xff] %v548
    %556 = vst [vmem:[#allocation5 + $0x30] sm:$0xff] %v549
    // Predicated region
    $region22: #{tpu_custom_call.1} parent=1 // pred_check
      _
    $region23: #{tpu_custom_call.1} parent=1 // pred_check_branch
      %558 = sbr.rel (0) target = $region25
    $region24: #{tpu_custom_call.1} parent=1 // pred_region
      %560 = vsyncadd [#allocation4], 0
      %s562 = sshll.u32 [#allocation5], 4
      %s563 = int_to_ptr.vmem [resolvable:$true] %s562
      %s564 = sshll.u32 %s4, 4
      %s565 = int_to_ptr.hbm [resolvable:$true] %s564
      %567 = dma.vmem_to_hbm [thread:$0]  %s563, 896, %s565, [#allocation4]
    $region25: #{tpu_custom_call.1} parent=1 // pred_fallthru
      _
    // Predicated region
    $region26: #{tpu_custom_call.1} parent=1 // pred_check
      _
    $region27: #{tpu_custom_call.1} parent=1 // pred_check_branch
      %569 = sbr.rel (0) target = $region29
    $region28: #{tpu_custom_call.1} parent=1 // pred_region
      %571 = dma.done [#allocation4], 896
    $region29: #{tpu_custom_call.1} parent=1 // pred_fallthru
      _
    %572 = vsyncpa [#allocation3], 1
    %573 = vsyncpa [#allocation4], 1

</llo_original>
